<compile_context>
chip_gen: v7x
topology: tpu7x:2x2x1
jax: 0.10.0
libtpu: 0.0.40
codegen_flags: <defaults>
</compile_context>

<pallas_src>
import functools

import jax
import jax.numpy as jnp
from jax.experimental import pallas as pl
from jax.experimental.pallas import tpu as pltpu

EPS = 1e-6
LANES = 128
SUBLANES = 8
MIN_CHUNK = SUBLANES * LANES           # 1024 elements
BLOCK_ROWS_MAX = 8192                  # 8192 x 128 x 4 B = 4 MiB per f32 input block


def _num_tensorcores():
    """2 TensorCores per chip on v7x; v5e/v6e are single-TC."""
    try:
        kind = jax.devices()[0].device_kind.lower()
    except Exception:
        return 1
    return 2 if ("v7" in kind or "7x" in kind) else 1


def _charbonnier_kernel(x_ref, y_ref, o_ref, *,
                        block_rows, blocks_per_core,
                        full_rows, rem_lanes, needs_mask):
    """Accumulate sum(sqrt((x - y)^2 + eps)) into a lane-dense (1,8,128) block."""
    c = pl.program_id(0)   # core axis (CORE_PARALLEL on v7x, size 1 elsewhere)
    i = pl.program_id(1)   # reduction axis over row blocks

    @pl.when(i == 0)
    def _():
        o_ref[...] = jnp.zeros_like(o_ref)

    d = x_ref[...].astype(jnp.float32) - y_ref[...].astype(jnp.float32)
    err = jnp.sqrt(d * d + jnp.float32(EPS))

    if block_rows % (4 * SUBLANES) == 0:
        # 4 independent partial-sum chains -> ILP keeps the fold hidden under DMA.
        def fold(e):
            return e.reshape(-1, 4, SUBLANES, LANES).sum(axis=0).sum(axis=0)
    else:
        def fold(e):
            return e.reshape(-1, SUBLANES, LANES).sum(axis=0)

    if not needs_mask:
        # Fully aligned problem: no masking anywhere.
        o_ref[...] += fold(err)[None, :, :]
    else:
        # Logical (unclamped) row offset of this block. Blocks past the end
        # (clamped duplicates from the core split) get row_start >= total rows
        # and are fully masked out.
        row_start = (c * blocks_per_core + i) * block_rows
        interior = row_start + block_rows <= full_rows

        @pl.when(interior)
        def _():   # fast path: every element of this block is valid
            o_ref[...] += fold(err)[None, :, :]

        @pl.when(jnp.logical_not(interior))
        def _():   # boundary / duplicate block: mask invalid elements to zero
            row_idx = row_start + jax.lax.broadcasted_iota(jnp.int32, err.shape, 0)
            if rem_lanes == 0:
                valid = row_idx < full_rows
            else:
                lane_idx = jax.lax.broadcasted_iota(jnp.int32, err.shape, 1)
                valid = (row_idx < full_rows) | (
                    (row_idx == full_rows) & (lane_idx < rem_lanes))
            o_ref[...] += fold(jnp.where(valid, err, jnp.float32(0.0)))[None, :, :]


@jax.jit
def l1_charbonnier_loss(x, y):
    """Pallas equivalent of L1_Charbonnier_loss.forward(X, Y) -> scalar."""
    assert x.shape == y.shape, "X and Y must have identical shapes"
    n = x.size
    xf = x.reshape(-1)
    yf = y.reshape(-1)

    # Pad only when the flat length is not lane-aligned (or the input is tiny);
    # the pad is < 128 elements (or < 1024 for tiny inputs) and fully masked
    # in-kernel. Lane-aligned inputs incur zero extra HBM traffic.
    if n % LANES != 0 or n < MIN_CHUNK:
        target = max(MIN_CHUNK, ((n + LANES - 1) // LANES) * LANES)
        xf = jnp.pad(xf, (0, target - n))
        yf = jnp.pad(yf, (0, target - n))
    total = xf.size
    rows = total // LANES                       # >= SUBLANES

    if rows % SUBLANES == 0:
        block_rows = min(BLOCK_ROWS_MAX, rows)
    else:
        block_rows = min(BLOCK_ROWS_MAX, (rows // SUBLANES) * SUBLANES)
    num_blocks = pl.cdiv(rows, block_rows)

    ncores = min(_num_tensorcores(), num_blocks)
    blocks_per_core = pl.cdiv(num_blocks, ncores)

    full_rows = n // LANES                      # complete valid rows
    rem_lanes = n % LANES                       # valid lanes in the partial row
    needs_mask = (
        rem_lanes != 0
        or full_rows != rows                        # appended zero-pad rows
        or rows % block_rows != 0                   # Pallas boundary block
        or ncores * blocks_per_core != num_blocks   # clamped duplicate blocks
    )

    xt = xf.reshape(rows, LANES)
    yt = yf.reshape(rows, LANES)

    def in_map(c, i):
        # Clamp so we never request a fully out-of-range block; such duplicate
        # blocks are masked to zero in-kernel via their logical row offset.
        return (jnp.minimum(c * blocks_per_core + i, num_blocks - 1), 0)

    kernel = functools.partial(
        _charbonnier_kernel,
        block_rows=block_rows,
        blocks_per_core=blocks_per_core,
        full_rows=full_rows,
        rem_lanes=rem_lanes,
        needs_mask=needs_mask,
    )

    if ncores > 1:
        dim_sems = (getattr(pltpu, "CORE_PARALLEL", "parallel"),
                    getattr(pltpu, "ARBITRARY", "arbitrary"))
    else:
        dim_sems = ("arbitrary", "arbitrary")

    bytes_accessed = (xt.size * xt.dtype.itemsize
                      + yt.size * yt.dtype.itemsize
                      + ncores * SUBLANES * LANES * 4)

    partials = pl.pallas_call(
        kernel,
        out_shape=jax.ShapeDtypeStruct((ncores, SUBLANES, LANES), jnp.float32),
        grid_spec=pltpu.PrefetchScalarGridSpec(
            num_scalar_prefetch=0,
            grid=(ncores, blocks_per_core),
            in_specs=[
                pl.BlockSpec((block_rows, LANES), in_map),
                pl.BlockSpec((block_rows, LANES), in_map),
            ],
            out_specs=pl.BlockSpec((1, SUBLANES, LANES), lambda c, i: (c, 0, 0)),
        ),
        compiler_params=pltpu.CompilerParams(
            dimension_semantics=dim_sems,
            vmem_limit_bytes=40 * 1024 * 1024,
        ),
        cost_estimate=pl.CostEstimate(
            flops=5 * total,
            transcendentals=total,
            bytes_accessed=bytes_accessed,
        ),
    )(xt, yt)

    return jnp.sum(partials) / jnp.float32(n)


def _reference(x, y):
    d = x.astype(jnp.float32) - y.astype(jnp.float32)
    return jnp.mean(jnp.sqrt(d * d + jnp.float32(EPS)))


if __name__ == "__main__":
    key = jax.random.PRNGKey(0)
    kx, ky = jax.random.split(key)

    # NCHW inputs, like the PyTorch module would receive.
    x = jax.random.normal(kx, (2, 4, 16, 16), dtype=jnp.float32)
    y = jax.random.normal(ky, (2, 4, 16, 16), dtype=jnp.float32)
    loss = jax.block_until_ready(l1_charbonnier_loss(x, y))
    ref = _reference(x, y)
    assert jnp.allclose(loss, ref, rtol=1e-5, atol=1e-6), (loss, ref)

    # Ragged shape exercising the lane-pad + in-kernel tail-mask path.
    kx2, ky2 = jax.random.split(ky)
    x2 = jax.random.normal(kx2, (3, 3, 7, 5), dtype=jnp.float32)
    y2 = jax.random.normal(ky2, (3, 3, 7, 5), dtype=jnp.float32)
    loss2 = jax.block_until_ready(l1_charbonnier_loss(x2, y2))
    ref2 = _reference(x2, y2)
    assert jnp.allclose(loss2, ref2, rtol=1e-5, atol=1e-6), (loss2, ref2)

    print("KERNEL_OK")
</pallas_src>

<mosaic_0001>
module attributes {stable_mosaic.version = 11 : i64} {
  func.func @_charbonnier_kernel(%arg0: i32, %arg1: i32, %arg2: memref<16x128xf32, #tpu.memory_space<vmem>>, %arg3: memref<16x128xf32, #tpu.memory_space<vmem>>, %arg4: memref<1x8x128xf32, #tpu.memory_space<vmem>>) attributes {dimension_semantics = [#tpu.dimension_semantics<arbitrary>, #tpu.dimension_semantics<arbitrary>], iteration_bounds = array<i64: 1, 1>, scalar_prefetch = 0 : i64, scratch_operands = 0 : i64, tpu.core_type = #tpu.core_type<tc>, window_params = [{transform_indices = @transform_0, window_bounds = array<i64: 16, 128>}, {transform_indices = @transform_1, window_bounds = array<i64: 16, 128>}, {transform_indices = @transform_2, window_bounds = array<i64: 1, 8, 128>}]} {
    %c0_i32 = arith.constant 0 : i32
    %0 = arith.cmpi eq, %arg1, %c0_i32 : i32
    %1 = arith.extui %0 : i1 to i32
    %c0_i32_0 = arith.constant 0 : i32
    %2 = arith.cmpi ne, %1, %c0_i32_0 : i32
    scf.if %2 {
      %cst_11 = arith.constant 0.000000e+00 : f32
      %16 = vector.broadcast %cst_11 : f32 to vector<1x8x128xf32>
      %c0_12 = arith.constant 0 : index
      %c0_13 = arith.constant 0 : index
      %c0_14 = arith.constant 0 : index
      %17 = vector.load %arg4[%c0_12, %c0_13, %c0_14] : memref<1x8x128xf32, #tpu.memory_space<vmem>>, vector<1x8x128xf32>
      tpu.vector_store %arg4[%c0_12, %c0_13, %c0_14], %16 {strides = array<i32>} : memref<1x8x128xf32, #tpu.memory_space<vmem>>, vector<1x8x128xf32>,
    } else {
    }
    %c0 = arith.constant 0 : index
    %c0_1 = arith.constant 0 : index
    %3 = vector.load %arg2[%c0, %c0_1] : memref<16x128xf32, #tpu.memory_space<vmem>>, vector<16x128xf32>
    %c0_2 = arith.constant 0 : index
    %c0_3 = arith.constant 0 : index
    %4 = vector.load %arg3[%c0_2, %c0_3] : memref<16x128xf32, #tpu.memory_space<vmem>>, vector<16x128xf32>
    %5 = arith.subf %3, %4 : vector<16x128xf32>
    %6 = arith.mulf %5, %5 : vector<16x128xf32>
    %cst = arith.constant 9.99999997E-7 : f32
    %7 = vector.broadcast %cst : f32 to vector<16x128xf32>
    %8 = arith.addf %6, %7 : vector<16x128xf32>
    %9 = math.sqrt %8 : vector<16x128xf32>
    %c0_4 = arith.constant 0 : index
    %c0_5 = arith.constant 0 : index
    %c0_6 = arith.constant 0 : index
    %10 = vector.load %arg4[%c0_4, %c0_5, %c0_6] : memref<1x8x128xf32, #tpu.memory_space<vmem>>, vector<1x8x128xf32>
    %11 = vector.shape_cast %9 : vector<16x128xf32> to vector<2x8x128xf32>
    %cst_7 = arith.constant dense<0.000000e+00> : vector<8x128xf32>
    %12 = vector.multi_reduction <add>, %11, %cst_7 [0] : vector<2x8x128xf32> to vector<8x128xf32>
    %13 = vector.shape_cast %12 : vector<8x128xf32> to vector<1x8x128xf32>
    %14 = arith.addf %10, %13 : vector<1x8x128xf32>
    %c0_8 = arith.constant 0 : index
    %c0_9 = arith.constant 0 : index
    %c0_10 = arith.constant 0 : index
    %15 = vector.load %arg4[%c0_8, %c0_9, %c0_10] : memref<1x8x128xf32, #tpu.memory_space<vmem>>, vector<1x8x128xf32>
    tpu.vector_store %arg4[%c0_8, %c0_9, %c0_10], %14 {strides = array<i32>} : memref<1x8x128xf32, #tpu.memory_space<vmem>>, vector<1x8x128xf32>,
    return
  }
  func.func @transform_0(%arg0: i32, %arg1: i32) -> (i32, i32) {
    %c1_i32 = arith.constant 1 : i32
    %0 = arith.muli %arg0, %c1_i32 : i32
    %1 = arith.addi %0, %arg1 : i32
    %c0_i32 = arith.constant 0 : i32
    %2 = arith.minsi %1, %c0_i32 : i32
    %c0_i32_0 = arith.constant 0 : i32
    %c0_i32_1 = arith.constant 0 : i32
    return %2, %c0_i32_0 : i32, i32
  }
  func.func @transform_1(%arg0: i32, %arg1: i32) -> (i32, i32) {
    %c1_i32 = arith.constant 1 : i32
    %0 = arith.muli %arg0, %c1_i32 : i32
    %1 = arith.addi %0, %arg1 : i32
    %c0_i32 = arith.constant 0 : i32
    %2 = arith.minsi %1, %c0_i32 : i32
    %c0_i32_0 = arith.constant 0 : i32
    %c0_i32_1 = arith.constant 0 : i32
    return %2, %c0_i32_0 : i32, i32
  }
  func.func @transform_2(%arg0: i32, %arg1: i32) -> (i32, i32, i32) {
    %c0_i32 = arith.constant 0 : i32
    %c0_i32_0 = arith.constant 0 : i32
    %c0_i32_1 = arith.constant 0 : i32
    return %arg0, %c0_i32, %c0_i32_0 : i32, i32, i32
  }
}

</mosaic_0001>

<llo_original>
// kernel: l1_charbonnier_loss.1
$region0: #{l1_charbonnier_loss.1}
  #allocation0 [shape = 'u32[]', space=smem, size = 0x4, offset = 0x4, fixed_abs, tag = 'smem constant byte address 0x4 - core index']
  #allocation1 [shape = 'u32[144,128]{1,0:T(1,128)}', space=vmem, size = 0x12000, scoped, tag = 'internal scratch']
  %s0 = inlined_call_operand.vmem [shape: f32[16,128], index: 0, kind: input, shape index: {}]
  %s1 = inlined_call_operand.vmem [shape: f32[16,128], index: 1, kind: input, shape index: {}]
  %s2 = inlined_call_operand.vmem [shape: f32[1,8,128], index: 2, kind: output, shape index: {}]
  %s3 = sld [smem:[#allocation0]]
  $region22: #{l1_charbonnier_loss.1} parent=0
    _
  %s5 = ssub.s32 1, %s3
  %s6 = scalar_select 0, %s5, %s3
  // Predicated region
  $region2: #{l1_charbonnier_loss.1} parent=0 // pred_check
    _
  $region3: #{l1_charbonnier_loss.1} parent=0 // pred_check_branch
    %8 = sbr.rel (0) target = $region5
  $region4: #{l1_charbonnier_loss.1} parent=0 // pred_region
    %s9 = sadd.s32 0, 0
    %p10 = scmp.lt.s32.totalorder %s9, 0
    %s11 = scalar_select %p10, %s9, 0
    %s12 = smul.u32 2, %s11
    %p13 = scmp.lt.s32.totalorder %s12, 1
    %s14 = scalar_select %p13, %s12, 1
    %s15 = smul.addr %s14, 8
    %s16 = scalar_lea.vmem %s0, %s15
    %s17 = sadd.s32 0, 0
    %p18 = scmp.lt.s32.totalorder %s17, 0
    %s19 = scalar_select %p18, %s17, 0
    %s20 = smul.u32 2, %s19
  $region5: #{l1_charbonnier_loss.1} parent=0 // pred_fallthru
    _
  // Predicated region
  $region6: #{l1_charbonnier_loss.1} parent=0 // pred_check
    _
  $region7: #{l1_charbonnier_loss.1} parent=0 // pred_check_branch
    %22 = sbr.rel (0) target = $region9
  $region8: #{l1_charbonnier_loss.1} parent=0 // pred_region
    %s23 = sadd.s32 0, 0
    %p24 = scmp.lt.s32.totalorder %s23, 0
    %s25 = scalar_select %p24, %s23, 0
    %s26 = smul.u32 2, %s25
    %p27 = scmp.lt.s32.totalorder %s26, 1
    %s28 = scalar_select %p27, %s26, 1
    %s29 = smul.addr %s28, 8
    %s30 = scalar_lea.vmem %s1, %s29
    %s31 = sadd.s32 0, 0
    %p32 = scmp.lt.s32.totalorder %s31, 0
    %s33 = scalar_select %p32, %s31, 0
    %s34 = smul.u32 2, %s33
  $region9: #{l1_charbonnier_loss.1} parent=0 // pred_fallthru
    _
  %s35 = sadd.s32 0, 0
  %p36 = scmp.lt.s32.totalorder %s35, 0
  %s37 = scalar_select %p36, %s35, 0
  %s38 = smul.u32 2, %s37
  %p39 = scmp.lt.s32.totalorder %s38, 1
  %s40 = scalar_select %p39, %s38, 1
  %s41 = smul.addr %s40, 8
  %s42 = scalar_lea.vmem %s0, %s41
  %s43 = sadd.s32 0, 0
  %p44 = scmp.lt.s32.totalorder %s43, 0
  %s45 = scalar_select %p44, %s43, 0
  %s46 = smul.u32 2, %s45
  %p47 = scmp.lt.s32.totalorder %s46, 1
  %s48 = scalar_select %p47, %s46, 1
  %s49 = smul.addr %s48, 8
  %s50 = scalar_lea.vmem %s1, %s49
  %s51 = sadd.s32 0, 0
  %p52 = scmp.lt.s32.totalorder %s51, 0
  %s53 = scalar_select %p52, %s51, 0
  %s54 = smul.u32 2, %s53
  %p55 = scmp.lt.s32.totalorder %s54, 1
  %s56 = scalar_select %p55, %s54, 1
  %s57 = smul.addr %s56, 8
  %s58 = scalar_lea.vmem %s0, %s57
  %s59 = sadd.s32 0, 0
  %p60 = scmp.lt.s32.totalorder %s59, 0
  %s61 = scalar_select %p60, %s59, 0
  %s62 = smul.u32 2, %s61
  %s63 = sadd.s32 0, 0
  %p64 = scmp.lt.s32.totalorder %s63, 0
  %s65 = scalar_select %p64, %s63, 0
  %s66 = smul.u32 2, %s65
  %p67 = scmp.lt.s32.totalorder %s66, 1
  %s68 = scalar_select %p67, %s66, 1
  %s69 = smul.addr %s68, 8
  %s70 = scalar_lea.vmem %s1, %s69
  %s71 = sadd.s32 0, 0
  %p72 = scmp.lt.s32.totalorder %s71, 0
  %s73 = scalar_select %p72, %s71, 0
  %s74 = smul.u32 2, %s73
  %p75 = scmp.eq.s32.totalorder 0, 0
  // Predicated region
  $region10: #{l1_charbonnier_loss.1} parent=0 // pred_check
    %p76 = pneg %p75
  $region11: #{l1_charbonnier_loss.1} parent=0 // pred_check_branch
    %78 = sbr.rel (%p76) target = $region13
  $region12: #{l1_charbonnier_loss.1} parent=0 // pred_region
    %79 = vst [vmem:[%s2] sm:$0xff] 0.0
  $region13: #{l1_charbonnier_loss.1} parent=0 // pred_fallthru
    _
  %v80 = vld [vmem:[%s58] sm:$0xff]
  %v81 = vld [vmem:[%s58 + $0x8] sm:$0xff]
  %v82 = vld [vmem:[%s70] sm:$0xff]
  %v83 = vld [vmem:[%s70 + $0x8] sm:$0xff]
  %v84 = vsub.f32 %v80, %v82
  %v85 = vsub.f32 %v81, %v83
  %v86 = vmul.f32 %v84, %v84
  %v87 = vmul.f32 %v85, %v85
  %v88 = vadd.f32 %v86, 1e-06
  %v89 = vadd.f32 %v87, 1e-06
  %v90 = vrsqrt.pop %v88
  %v91 = vmul.f32 %v88, %v90
  %vm92 = vcmp.eq.f32.partialorder %v88, inf
  %v93 = vsel %vm92, %v88, %v91
  %vm94 = vcmp.eq.f32.partialorder %v88, 0.0
  %v95 = vand.u32 %v88, 2147483648
  %v96 = vsel %vm94, %v95, %v93
  %v97 = vrsqrt.pop %v89
  %v98 = vmul.f32 %v89, %v97
  %vm99 = vcmp.eq.f32.partialorder %v89, inf
  %v100 = vsel %vm99, %v89, %v98
  %vm101 = vcmp.eq.f32.partialorder %v89, 0.0
  %v102 = vand.u32 %v89, 2147483648
  %v103 = vsel %vm101, %v102, %v100
  %v104 = vld [vmem:[%s2] sm:$0xff]
  %v105 = vadd.f32 %v96, %v103
  %v106 = vadd.f32 %v104, %v105
  %107 = vst [vmem:[%s2] sm:$0xff] %v106
  // Predicated region
  $region14: #{l1_charbonnier_loss.1} parent=0 // pred_check
    _
  $region15: #{l1_charbonnier_loss.1} parent=0 // pred_check_branch
    %109 = sbr.rel (0) target = $region17
  $region16: #{l1_charbonnier_loss.1} parent=0 // pred_region
    _
  $region17: #{l1_charbonnier_loss.1} parent=0 // pred_fallthru
    _
  // Predicated region
  $region18: #{l1_charbonnier_loss.1} parent=0 // pred_check
    _
  $region19: #{l1_charbonnier_loss.1} parent=0 // pred_check_branch
    %111 = sbr.rel (0) target = $region21
  $region20: #{l1_charbonnier_loss.1} parent=0 // pred_region
    _
  $region21: #{l1_charbonnier_loss.1} parent=0 // pred_fallthru
    _

</llo_original>
